<compile_context>
chip_gen: v7x
topology: tpu7x:2x2x1
jax: 0.10.0
libtpu: 0.0.40
codegen_flags: <defaults>
</compile_context>

<pallas_src>
import math

import jax
import jax.numpy as jnp
from jax.experimental import pallas as pl
from jax.experimental.pallas import tpu as pltpu

_INV_SQRT2 = 0.7071067811865475


def _convbn_gelu_kernel(x_ref, w_ref, shift_ref, o_ref):
    # x_ref:     (Cin, THW)  bf16 tile of one image's flattened spatial dim
    # w_ref:     (Cout, Cin) bf16 1x1-conv weight with BN scale folded in
    # shift_ref: (Cout, 1)   f32 folded BN shift  (beta - mean * scale)
    # o_ref:     (Cout, THW) f32 output tile (NCHW layout, lane-dense)
    y = jnp.dot(w_ref[...], x_ref[...], preferred_element_type=jnp.float32)
    y = y + shift_ref[...]
    # exact GELU (PyTorch nn.GELU default, approximate='none')
    o_ref[...] = (0.5 * y * (1.0 + jax.lax.erf(y * _INV_SQRT2))).astype(o_ref.dtype)


def convbnrelu_forward(x_nchw, weight, bn_gamma, bn_beta, bn_mean, bn_var,
                       eps=1e-5, thw=512):
    """1x1 conv (no bias) + BatchNorm2d (inference) + GELU, fused in Pallas.

    x_nchw : (N, Cin, H, W) float32
    weight : (Cout, Cin, 1, 1)  (PyTorch Conv2d layout)
    Returns (N, Cout, H, W) float32.
    """
    N, Cin, H, W = x_nchw.shape
    Cout = weight.shape[0]
    HW = H * W

    # Fold BN (inference semantics) into the conv weight: (W x) * s == (W*s) x.
    scale = bn_gamma / jnp.sqrt(bn_var + eps)                       # (Cout,)
    shift = (bn_beta - bn_mean * scale).reshape(Cout, 1).astype(jnp.float32)
    w_mat = (weight.reshape(Cout, Cin) * scale[:, None]).astype(jnp.bfloat16)

    # NCHW kept as-is: reshape to (N, Cin, H*W) is a free view, no transpose.
    x_flat = x_nchw.reshape(N, Cin, HW).astype(jnp.bfloat16)

    # Lane-dense spatial tile: multiple of 128, clamped to problem size and to a
    # VMEM budget that is safe across v5e/v6e/v7x default scoped VMEM.
    thw = max(128, (int(thw) // 128) * 128)
    thw = min(thw, pl.cdiv(HW, 128) * 128)
    vmem_budget = 24 * 1024 * 1024

    def _tile_bytes(t):
        # double-buffered x (bf16) + out (f32) blocks + double-buffered
        # grid-invariant weight/shift operands.
        return (2 * (Cin * t * 2) + 2 * (Cout * t * 4)
                + 2 * (Cout * Cin * 2 + Cout * 4))

    while thw > 128 and _tile_bytes(thw) > vmem_budget:
        thw //= 2
    # TODO(synk): for very large Cin/Cout add grid axes over Cout (parallel) and
    # Cin (arbitrary, with a VMEM f32 accumulator) instead of a resident weight.

    HW_pad = pl.cdiv(HW, thw) * thw
    if HW_pad != HW:
        x_flat = jnp.pad(x_flat, ((0, 0), (0, 0), (0, HW_pad - HW)))

    grid = (N, HW_pad // thw)

    cost = pl.CostEstimate(
        flops=2 * N * HW_pad * Cin * Cout,
        transcendentals=N * HW_pad * Cout,
        bytes_accessed=(x_flat.size * 2 + w_mat.size * 2 + shift.size * 4
                        + N * Cout * HW_pad * 4),
    )

    out = pl.pallas_call(
        _convbn_gelu_kernel,
        out_shape=jax.ShapeDtypeStruct((N, Cout, HW_pad), jnp.float32),
        grid_spec=pltpu.PrefetchScalarGridSpec(
            num_scalar_prefetch=0,
            grid=grid,
            in_specs=[
                # batch dim squeezed out -> kernel sees (Cin, thw)
                pl.BlockSpec((None, Cin, thw), lambda n, j: (n, 0, j)),
                pl.BlockSpec((Cout, Cin), lambda n, j: (0, 0)),
                pl.BlockSpec((Cout, 1), lambda n, j: (0, 0)),
            ],
            out_specs=pl.BlockSpec((None, Cout, thw), lambda n, j: (n, 0, j)),
        ),
        compiler_params=pltpu.CompilerParams(
            dimension_semantics=("parallel", "parallel")),
        cost_estimate=cost,
    )(x_flat, w_mat, shift)

    out = out[:, :, :HW].reshape(N, Cout, H, W)
    return out


if __name__ == "__main__":
    key = jax.random.PRNGKey(0)
    k_x, k_w, k_g, k_b, k_m, k_v = jax.random.split(key, 6)

    N, Cin, H, W = 2, 4, 16, 16
    Cout = 8

    x = jax.random.normal(k_x, (N, Cin, H, W), dtype=jnp.float32)

    # Conv2d(Cin, Cout, k=1, bias=False) -> weight (Cout, Cin, 1, 1)
    fan_in = Cin * 1 * 1
    bound = 1.0 / math.sqrt(fan_in)
    weight = jax.random.uniform(k_w, (Cout, Cin, 1, 1),
                                minval=-bound, maxval=bound,
                                dtype=jnp.float32)
    # BatchNorm2d(Cout) params / running stats (inference-mode BN).
    bn_gamma = 1.0 + 0.1 * jax.random.normal(k_g, (Cout,), dtype=jnp.float32)
    bn_beta = 0.1 * jax.random.normal(k_b, (Cout,), dtype=jnp.float32)
    bn_mean = 0.05 * jax.random.normal(k_m, (Cout,), dtype=jnp.float32)
    bn_var = jnp.abs(1.0 + 0.1 * jax.random.normal(k_v, (Cout,),
                                                   dtype=jnp.float32))

    y = convbnrelu_forward(x, weight, bn_gamma, bn_beta, bn_mean, bn_var)
    jax.block_until_ready(y)

    # Pure-JAX reference of the same math using the same bf16-rounded operands.
    scale = bn_gamma / jnp.sqrt(bn_var + 1e-5)
    shift = bn_beta - bn_mean * scale
    w_ref = (weight.reshape(Cout, Cin) * scale[:, None]
             ).astype(jnp.bfloat16).astype(jnp.float32)
    x_ref = x.reshape(N, Cin, H * W).astype(jnp.bfloat16).astype(jnp.float32)
    ref = jnp.einsum("oc,ncs->nos", w_ref, x_ref) + shift[None, :, None]
    ref = 0.5 * ref * (1.0 + jax.lax.erf(ref / math.sqrt(2.0)))
    ref = ref.reshape(N, Cout, H, W)
    assert jnp.allclose(y, ref, atol=1e-3, rtol=1e-3), \
        float(jnp.max(jnp.abs(y - ref)))

    print("KERNEL_OK")
</pallas_src>

<mosaic_0001>
module attributes {stable_mosaic.version = 11 : i64} {
  func.func @_convbn_gelu_kernel(%arg0: i32, %arg1: i32, %arg2: memref<1x4x256xbf16, #tpu.memory_space<vmem>>, %arg3: memref<8x4xbf16, #tpu.memory_space<vmem>>, %arg4: memref<8x1xf32, #tpu.memory_space<vmem>>, %arg5: memref<1x8x256xf32, #tpu.memory_space<vmem>>) attributes {dimension_semantics = [#tpu.dimension_semantics<parallel>, #tpu.dimension_semantics<parallel>], iteration_bounds = array<i64: 2, 1>, scalar_prefetch = 0 : i64, scratch_operands = 0 : i64, tpu.core_type = #tpu.core_type<tc>, window_params = [{transform_indices = @transform_0, window_bounds = array<i64: 1, 4, 256>}, {pipeline_mode = #tpu.pipeline_mode<synchronous>, transform_indices = @transform_1, window_bounds = array<i64: 8, 4>}, {pipeline_mode = #tpu.pipeline_mode<synchronous>, transform_indices = @transform_2, window_bounds = array<i64: 8, 1>}, {transform_indices = @transform_3, window_bounds = array<i64: 1, 8, 256>}]} {
    %c0 = arith.constant 0 : index
    %c0_0 = arith.constant 0 : index
    %0 = vector.load %arg3[%c0, %c0_0] : memref<8x4xbf16, #tpu.memory_space<vmem>>, vector<8x4xbf16>
    %c0_1 = arith.constant 0 : index
    %c0_2 = arith.constant 0 : index
    %c0_3 = arith.constant 0 : index
    %1 = vector.load %arg2[%c0_1, %c0_2, %c0_3] : memref<1x4x256xbf16, #tpu.memory_space<vmem>>, vector<1x4x256xbf16>
    %2 = vector.shape_cast %1 : vector<1x4x256xbf16> to vector<4x256xbf16>
    %cst = arith.constant dense<0.000000e+00> : vector<8x256xf32>
    %3 = tpu.matmul %0, %2, %cst {dimension_numbers = #tpu.dot_dimension_numbers<[1], [0], [0], [1], [0, 0, 1, 1], [], []>} : vector<8x4xbf16>, vector<4x256xbf16>, vector<8x256xf32> -> vector<8x256xf32>
    %c0_4 = arith.constant 0 : index
    %c0_5 = arith.constant 0 : index
    %4 = vector.load %arg4[%c0_4, %c0_5] : memref<8x1xf32, #tpu.memory_space<vmem>>, vector<8x1xf32>
    %5 = vector.broadcast %4 : vector<8x1xf32> to vector<8x256xf32>
    %6 = arith.addf %3, %5 : vector<8x256xf32>
    %cst_6 = arith.constant 5.000000e-01 : f32
    %7 = vector.broadcast %cst_6 : f32 to vector<8x256xf32>
    %8 = arith.mulf %7, %6 : vector<8x256xf32>
    %cst_7 = arith.constant 0.707106769 : f32
    %9 = vector.broadcast %cst_7 : f32 to vector<8x256xf32>
    %10 = arith.mulf %6, %9 : vector<8x256xf32>
    %11 = math.erf %10 : vector<8x256xf32>
    %cst_8 = arith.constant 1.000000e+00 : f32
    %12 = vector.broadcast %cst_8 : f32 to vector<8x256xf32>
    %13 = arith.addf %12, %11 : vector<8x256xf32>
    %14 = arith.mulf %8, %13 : vector<8x256xf32>
    %c0_9 = arith.constant 0 : index
    %c0_10 = arith.constant 0 : index
    %c0_11 = arith.constant 0 : index
    %15 = vector.load %arg5[%c0_9, %c0_10, %c0_11] : memref<1x8x256xf32, #tpu.memory_space<vmem>>, vector<1x8x256xf32>
    %16 = vector.shape_cast %15 : vector<1x8x256xf32> to vector<8x256xf32>
    %17 = vector.shape_cast %14 : vector<8x256xf32> to vector<1x8x256xf32>
    tpu.vector_store %arg5[%c0_9, %c0_10, %c0_11], %17 {strides = array<i32>} : memref<1x8x256xf32, #tpu.memory_space<vmem>>, vector<1x8x256xf32>,
    return
  }
  func.func @transform_0(%arg0: i32, %arg1: i32) -> (i32, i32, i32) {
    %c0_i32 = arith.constant 0 : i32
    %c0_i32_0 = arith.constant 0 : i32
    return %arg0, %c0_i32, %arg1 : i32, i32, i32
  }
  func.func @transform_1(%arg0: i32, %arg1: i32) -> (i32, i32) {
    %c0_i32 = arith.constant 0 : i32
    %c0_i32_0 = arith.constant 0 : i32
    %c0_i32_1 = arith.constant 0 : i32
    return %c0_i32, %c0_i32_0 : i32, i32
  }
  func.func @transform_2(%arg0: i32, %arg1: i32) -> (i32, i32) {
    %c0_i32 = arith.constant 0 : i32
    %c0_i32_0 = arith.constant 0 : i32
    %c0_i32_1 = arith.constant 0 : i32
    return %c0_i32, %c0_i32_0 : i32, i32
  }
  func.func @transform_3(%arg0: i32, %arg1: i32) -> (i32, i32, i32) {
    %c0_i32 = arith.constant 0 : i32
    %c0_i32_0 = arith.constant 0 : i32
    return %arg0, %c0_i32, %arg1 : i32, i32, i32
  }
}

</mosaic_0001>

<llo_original>
// kernel: tpu_custom_call.1
$region0: #{tpu_custom_call.1}
  #allocation0 [shape = 'u32[]', space=smem, size = 0x4, offset = 0x4, fixed_abs, tag = 'smem constant byte address 0x4 - core index']
  #allocation1 [shape = 'u32[144,128]{1,0:T(1,128)}', space=vmem, size = 0x12000, scoped, tag = 'internal scratch']
  %s0 = inlined_call_operand.vmem [shape: bf16[2,4,256], index: 0, kind: input, shape index: {}]
  %s1 = inlined_call_operand.vmem [shape: bf16[8,4], index: 1, kind: input, shape index: {}]
  %s2 = inlined_call_operand.vmem [shape: f32[8,1], index: 2, kind: input, shape index: {}]
  %s3 = inlined_call_operand.hbm [shape: f32[2,8,256], index: 3, kind: output, shape index: {}]
  %s4 = sld [smem:[#allocation0]]
  $region45: #{tpu_custom_call.1} parent=0
    _
  %s6 = ssub.s32 1, %s4
  %s7 = scalar_select 0, %s6, %s4
  $region1: #{tpu_custom_call.1} parent=0
    #allocation2 [shape = 'u8[16384]{0}', space=vmem, size = 0x4000, scoped, tag = 'output window, operand 0']
    #allocation3 [shape = 's32[2]{0}', space=sflag, size = 0x8, scoped, tag = 'scoped memory for tpu_custom_call.1']
    %8 = vsyncpa [#allocation3], 0
    %s9 = scalar_lea.sflag [#allocation3], 1
    %10 = vsyncpa %s9, 0
    loop: start=0, step=1, limit=4
    $region2: #{tpu_custom_call.1} parent=1 // loop_pre_header
      _
    $region3: #{tpu_custom_call.1} parent=1 // loop_header
      %s12 = sphi 0, %s16
      %p13 = scmp.ge.s32.totalorder %s12, 4
      %s19 = sphi 0, %s31
      %s20 = sphi 0, %s27
      %s21 = sphi 0, %s19
      %s22 = sphi 0, %s20
      %s23 = sphi 0, %s21
      %s24 = sphi 0, %s22
      %s36 = sphi 0, %s38
      %s39 = sphi 0, %s36
      %s40 = sphi 0, %s39
      %s56 = sphi 0, %s40
      %s60 = sphi 0, %s60
      %s62 = sphi 0, %s60
      %s63 = sphi 0, %s62
      %s77 = sphi 0, %s63
      %s81 = sphi 0, %s81
      %s83 = sphi 0, %s81
      %s84 = sphi 0, %s83
      %s98 = sphi 0, %s84
      %s106 = sphi 0, %s108
      %s109 = sphi 0, %s106
      %s110 = sphi 0, %s109
      %s126 = sphi 0, %s110
    $region4: #{tpu_custom_call.1} parent=1 // loop_header_branch
      %15 = sbr.rel (%p13) target = $region8
    $region5: #{tpu_custom_call.1} parent=1 // loop_body
      %s17 = ssub.s32 %s12, 1
      %s18 = ssub.s32 %s12, 2
      %s25 = sadd.s32 1, %s20
      %p26 = scmp.ge.s32.totalorder %s25, 1
      %s27 = scalar_select %p26, 0, %s25
      %s28 = sadd.s32 1, %s19
      %s29 = scalar_select %p26, %s28, %s19
      %p30 = scmp.ge.s32.totalorder %s29, 2
      %s31 = scalar_select %p30, 0, %s29
      %s32 = ssub.s32 %s19, %s31
      %s33 = ssub.s32 %s20, %s27
      %s34 = sor.u32 %s32, %s33
      %p35 = scmp.eq.s32.totalorder %s34, 0
      %s37 = sadd.s32 %s36, 1
      %s38 = scalar_select %p35, %s36, %s37
      %p41 = pneg %p35
      %p42 = scmp.eq.s32.totalorder %s12, 1
      %p43 = por %p41, %p42
      %p44 = scmp.ne.s32.totalorder %s36, %s39
      %p45 = scmp.eq.s32.totalorder %s12, 0
      %p46 = por %p44, %p45
      %p47 = scmp.ne.s32.totalorder %s36, %s39
      %p48 = scmp.eq.s32.totalorder %s17, 1
      %p49 = por %p47, %p48
      %p50 = scmp.ne.s32.totalorder %s39, %s40
      %p51 = scmp.eq.s32.totalorder %s17, 0
      %p52 = por %p50, %p51
      %p53 = scmp.ne.s32.totalorder %s39, %s40
      %p54 = scmp.eq.s32.totalorder %s18, 1
      %p55 = por %p53, %p54
      %p57 = scmp.ne.s32.totalorder %s40, %s56
      %p58 = scmp.eq.s32.totalorder %s18, 0
      %p59 = por %p57, %p58
      %s61 = sadd.s32 %s60, 1
      %p64 = scmp.eq.s32.totalorder %s12, 1
      %p65 = scmp.ne.s32.totalorder %s60, %s62
      %p66 = scmp.eq.s32.totalorder %s12, 0
      %p67 = por %p65, %p66
      %p68 = scmp.ne.s32.totalorder %s60, %s62
      %p69 = scmp.eq.s32.totalorder %s17, 1
      %p70 = por %p68, %p69
      %p71 = scmp.ne.s32.totalorder %s62, %s63
      %p72 = scmp.eq.s32.totalorder %s17, 0
      %p73 = por %p71, %p72
      %p74 = scmp.ne.s32.totalorder %s62, %s63
      %p75 = scmp.eq.s32.totalorder %s18, 1
      %p76 = por %p74, %p75
      %p78 = scmp.ne.s32.totalorder %s63, %s77
      %p79 = scmp.eq.s32.totalorder %s18, 0
      %p80 = por %p78, %p79
      %s82 = sadd.s32 %s81, 1
      %p85 = scmp.eq.s32.totalorder %s12, 1
      %p86 = scmp.ne.s32.totalorder %s81, %s83
      %p87 = scmp.eq.s32.totalorder %s12, 0
      %p88 = por %p86, %p87
      %p89 = scmp.ne.s32.totalorder %s81, %s83
      %p90 = scmp.eq.s32.totalorder %s17, 1
      %p91 = por %p89, %p90
      %p92 = scmp.ne.s32.totalorder %s83, %s84
      %p93 = scmp.eq.s32.totalorder %s17, 0
      %p94 = por %p92, %p93
      %p95 = scmp.ne.s32.totalorder %s83, %s84
      %p96 = scmp.eq.s32.totalorder %s18, 1
      %p97 = por %p95, %p96
      %p99 = scmp.ne.s32.totalorder %s84, %s98
      %p100 = scmp.eq.s32.totalorder %s18, 0
      %p101 = por %p99, %p100
      %s102 = ssub.s32 %s19, %s31
      %s103 = ssub.s32 %s20, %s27
      %s104 = sor.u32 %s102, %s103
      %p105 = scmp.eq.s32.totalorder %s104, 0
      %s107 = sadd.s32 %s106, 1
      %s108 = scalar_select %p105, %s106, %s107
      %p111 = pneg %p105
      %p112 = scmp.eq.s32.totalorder %s12, 1
      %p113 = por %p111, %p112
      %p114 = scmp.ne.s32.totalorder %s106, %s109
      %p115 = scmp.eq.s32.totalorder %s12, 0
      %p116 = por %p114, %p115
      %p117 = scmp.ne.s32.totalorder %s106, %s109
      %p118 = scmp.eq.s32.totalorder %s17, 1
      %p119 = por %p117, %p118
      %p120 = scmp.ne.s32.totalorder %s109, %s110
      %p121 = scmp.eq.s32.totalorder %s17, 0
      %p122 = por %p120, %p121
      %p123 = scmp.ne.s32.totalorder %s109, %s110
      %p124 = scmp.eq.s32.totalorder %s18, 1
      %p125 = por %p123, %p124
      %p127 = scmp.ne.s32.totalorder %s110, %s126
      %p128 = scmp.eq.s32.totalorder %s18, 0
      %p129 = por %p127, %p128
      %p130 = scmp.le.s32.totalorder 1, %s12
      %p131 = scmp.lt.s32.totalorder %s12, 3
      %p132 = pnand %p130, %p131
      %p133 = pneg %p132
      // Predicated region
      $region9: #{tpu_custom_call.1} parent=5 // pred_check
        _
      $region10: #{tpu_custom_call.1} parent=5 // pred_check_branch
        %135 = sbr.rel (%p132) target = $region12
      $region11: #{tpu_custom_call.1} parent=5 // pred_region
        %s136 = ssub.s32 %s12, 1
        // Predicated region
        $region13: #{tpu_custom_call.1} parent=11 // pred_check
          %p137 = pneg %p73
        $region14: #{tpu_custom_call.1} parent=11 // pred_check_branch
          %139 = sbr.rel (%p137) target = $region16
        $region15: #{tpu_custom_call.1} parent=11 // pred_region
          _
        $region16: #{tpu_custom_call.1} parent=11 // pred_fallthru
          _
        // Predicated region
        $region17: #{tpu_custom_call.1} parent=11 // pred_check
          %p140 = pneg %p94
        $region18: #{tpu_custom_call.1} parent=11 // pred_check_branch
          %142 = sbr.rel (%p140) target = $region20
        $region19: #{tpu_custom_call.1} parent=11 // pred_region
          _
        $region20: #{tpu_custom_call.1} parent=11 // pred_fallthru
          _
      $region12: #{tpu_custom_call.1} parent=5 // pred_fallthru
        _
      %p143 = scmp.lt.s32.totalorder %s12, 2
      // Predicated region
      $region21: #{tpu_custom_call.1} parent=5 // pred_check
        %p144 = pneg %p143
      $region22: #{tpu_custom_call.1} parent=5 // pred_check_branch
        %146 = sbr.rel (%p144) target = $region24
      $region23: #{tpu_custom_call.1} parent=5 // pred_region
        // Predicated region
        $region25: #{tpu_custom_call.1} parent=23 // pred_check
          %p147 = pneg %p46
        $region26: #{tpu_custom_call.1} parent=23 // pred_check_branch
          %149 = sbr.rel (%p147) target = $region28
        $region27: #{tpu_custom_call.1} parent=23 // pred_region
          %s150 = smul.u32 2, %s20
          %p151 = scmp.lt.s32.totalorder %s19, 1
          %s152 = scalar_select %p151, %s19, 1
          %p153 = scmp.lt.s32.totalorder %s150, 1
          %s154 = scalar_select %p153, %s150, 1
          %s155 = smul.addr %s152, 2
          %s156 = sadd.s32 %s154, %s155
          %s157 = smul.addr %s156, 2
          %s158 = scalar_lea.vmem %s0, %s157
          %s159 = smul.u32 2, %s20
        $region28: #{tpu_custom_call.1} parent=23 // pred_fallthru
          _
      $region24: #{tpu_custom_call.1} parent=5 // pred_fallthru
        _
      %p160 = scmp.le.s32.totalorder 1, %s12
      %p161 = scmp.lt.s32.totalorder %s12, 3
      %p162 = pnand %p160, %p161
      %p163 = pneg %p162
      // Predicated region
      $region29: #{tpu_custom_call.1} parent=5 // pred_check
        _
      $region30: #{tpu_custom_call.1} parent=5 // pred_check_branch
        %165 = sbr.rel (%p162) target = $region32
      $region31: #{tpu_custom_call.1} parent=5 // pred_region
        %s166 = ssub.s32 %s12, 1
        %s167 = smul.u32 2, %s22
        %p168 = scmp.lt.s32.totalorder %s21, 1
        %s169 = scalar_select %p168, %s21, 1
        %p170 = scmp.lt.s32.totalorder %s167, 1
        %s171 = scalar_select %p170, %s167, 1
        %s172 = smul.addr %s169, 2
        %s173 = sadd.s32 %s171, %s172
        %s174 = smul.addr %s173, 2
        %s175 = scalar_lea.vmem %s0, %s174
        %p176 = pneg %p52
        %p177 = pneg %p49
        %p178 = pneg %p73
        %p179 = pneg %p70
        %p180 = pneg %p94
        %p181 = pneg %p91
        %p182 = pneg %p122
        %p183 = pneg %p119
        %s184 = sand.u32 %s109, 1
        %s185 = scalar_lea.sflag [#allocation3], %s184
        %s186 = sand.u32 %s109, 1
        %s187 = smul.addr %s186, 16
        %s188 = scalar_lea.vmem [#allocation2], %s187
        %s189 = smul.u32 2, %s22
        %p190 = scmp.lt.s32.totalorder %s21, 1
        %s191 = scalar_select %p190, %s21, 1
        %p192 = scmp.lt.s32.totalorder %s189, 1
        %s193 = scalar_select %p192, %s189, 1
        %s194 = smul.addr %s191, 2
        %s195 = sadd.s32 %s193, %s194
        %s196 = smul.addr %s195, 2
        %s197 = scalar_lea.vmem %s0, %s196
        %s198 = smul.u32 2, %s22
        %s199 = smul.u32 2, %s22
        %v201 = vld [vmem:[%s1] sm:$0xf]
        %v202 = vld [vmem:[%s197] sm:$0xf]
        %v203 = vld [vmem:[%s2] sm:$0xff]
        %205 = vset.pattern.permute.xlu0 0
        %206 = vperm.xlu0 %205, %v203
        %v207 = vpop.permute.xlu0 %206
        %v211 = vunpack.c.l.s4 1983009808
        %v212 = vunpack.c.0.s8 %v211
        %v213 = vlaneseq
        %v214 = vshrl.u32 %v213, 7
        %v215 = vsub.s32 %v212, %v214
        %v216 = vrot.slane %v202, %v215
        %v217 = vcombine.high %v216, %v216
        %vm218 = vcmask 31744
        %v220 = vsel %vm218, %v201, 0
        %vm222 = vcmask 1041408
        %v224 = vsel %vm222, %v216, 0
        %v227 = vsel %vm222, %v217, 0
        %229 = vmatprep.subr.bf16.mxu0 %v227
        %230 = vmatpush1.bf16.msra.mxu0 %v224
        %231 = vmatprep.subr.bf16.mxu0 0
        %232 = vmatpush1.bf16.msra.mxu0 0
        %233 = vmatprep.subr.bf16.mxu0 0
        %234 = vmatpush1.bf16.msra.mxu0 0
        %235 = vmatprep.subr.bf16.mxu0 0
        %236 = vmatpush1.bf16.msra.mxu0 0
        %237 = vmatprep.subr.bf16.mxu0 0
        %238 = vmatpush1.bf16.msra.mxu0 0
        %239 = vmatprep.subr.bf16.mxu0 0
        %240 = vmatpush1.bf16.msra.mxu0 0
        %241 = vmatprep.subr.bf16.mxu0 0
        %242 = vmatpush1.bf16.msra.mxu0 0
        %243 = vmatprep.subr.bf16.mxu0 0
        %244 = vmatpush1.bf16.msra.mxu0 0
        %245 = vmatprep.subr.bf16.mxu0 0
        %246 = vmatpush1.bf16.msra.mxu0 0
        %247 = vmatprep.subr.bf16.mxu0 0
        %248 = vmatpush1.bf16.msra.mxu0 0
        %249 = vmatprep.subr.bf16.mxu0 0
        %250 = vmatpush1.bf16.msra.mxu0 0
        %251 = vmatprep.subr.bf16.mxu0 0
        %252 = vmatpush1.bf16.msra.mxu0 0
        %253 = vmatprep.subr.bf16.mxu0 0
        %254 = vmatpush1.bf16.msra.mxu0 0
        %255 = vmatprep.subr.bf16.mxu0 0
        %256 = vmatpush1.bf16.msra.mxu0 0
        %257 = vmatprep.subr.bf16.mxu0 0
        %258 = vmatpush1.bf16.msra.mxu0 0
        %259 = vmatprep.subr.bf16.mxu0 0
        %260 = vmatpush1.bf16.msra.mxu0 0
        %261 = vmatprep.mubr.bf16.mxu0 0
        %262 = vmatmul.mubr.bf16.gmra.mrb[0].mxu0 %v220
        %v263 = vpop.f32.mrb[0].mxu0
        %v264 = vadd.f32 %v207, %v263
        %v265 = vpop.f32.mrb[0].mxu0
        %v266 = vadd.f32 %v207, %v265
        %v267 = vpop.f32.mrb[0].mxu0
        %v268 = vpop.f32.mrb[0].mxu0
        %269 = vdwg.mxu0
        %v270 = vmul.f32 %v264, 0.5
        %v271 = vmul.f32 %v266, 0.5
        %v272 = vmul.f32 %v264, 0.70710677
        %v273 = vmul.f32 %v266, 0.70710677
        %v274 = verf.f32.pop %v272
        %v275 = verf.f32.pop %v273
        %v276 = vadd.f32 %v274, 1.0
        %v277 = vadd.f32 %v275, 1.0
        %v278 = vmul.f32 %v270, %v276
        %v279 = vmul.f32 %v271, %v277
        %280 = vst [vmem:[%s188] sm:$0xff] %v278
        %281 = vst [vmem:[%s188 + $0x8] sm:$0xff] %v279
        %s282 = sand.u32 %s109, 1
        %s283 = scalar_lea.sflag [#allocation3], %s282
        %s284 = sand.u32 %s109, 1
        %s285 = smul.addr %s284, 16
        %s286 = scalar_lea.vmem [#allocation2], %s285
        // Predicated region
        $region33: #{tpu_custom_call.1} parent=31 // pred_check
          %p287 = pneg %p119
        $region34: #{tpu_custom_call.1} parent=31 // pred_check_branch
          %289 = sbr.rel (%p287) target = $region36
        $region35: #{tpu_custom_call.1} parent=31 // pred_region
          %s290 = smul.u32 2, %s22
          %s292 = ssub.s32 256, 256
          %293 = vsyncadd %s283, %s292
          %s294 = smul.addr %s21, 2
          %s295 = sadd.s32 %s290, %s294
          %s296 = smul.addr %s295, 128
          %s297 = scalar_lea.hbm %s3, %s296
          %s299 = sshll.u32 %s286, 4
          %s300 = int_to_ptr.vmem [resolvable:$true] %s299
          %302 = dma.vmem_to_hbm [thread:$0]  %s300, 256, %s297, %s283
        $region36: #{tpu_custom_call.1} parent=31 // pred_fallthru
          _
      $region32: #{tpu_custom_call.1} parent=5 // pred_fallthru
        _
      %p303 = scmp.le.s32.totalorder 2, %s12
      // Predicated region
      $region37: #{tpu_custom_call.1} parent=5 // pred_check
        %p304 = pneg %p303
      $region38: #{tpu_custom_call.1} parent=5 // pred_check_branch
        %306 = sbr.rel (%p304) target = $region40
      $region39: #{tpu_custom_call.1} parent=5 // pred_region
        %s307 = ssub.s32 %s12, 2
        // Predicated region
        $region41: #{tpu_custom_call.1} parent=39 // pred_check
          %p308 = pneg %p125
        $region42: #{tpu_custom_call.1} parent=39 // pred_check_branch
          %310 = sbr.rel (%p308) target = $region44
        $region43: #{tpu_custom_call.1} parent=39 // pred_region
          %s311 = sand.u32 %s110, 1
          %s312 = scalar_lea.sflag [#allocation3], %s311
          %s313 = sand.u32 %s110, 1
          %s314 = smul.addr %s313, 16
          %s315 = scalar_lea.vmem [#allocation2], %s314
          %316 = dma.done %s312, 256
        $region44: #{tpu_custom_call.1} parent=39 // pred_fallthru
          _
      $region40: #{tpu_custom_call.1} parent=5 // pred_fallthru
        _
    $region6: #{tpu_custom_call.1} parent=1 // loop_footer
      %s16 = sadd.s32 1, %s12
    $region7: #{tpu_custom_call.1} parent=1 // loop_footer_branch
      %11 = sbr.rel target = $region3
    $region8: #{tpu_custom_call.1} parent=1 // loop_exit
      _
    %317 = vsyncpa [#allocation3], 1
    %s318 = scalar_lea.sflag [#allocation3], 1
    %319 = vsyncpa %s318, 1

</llo_original>
